<compile_context>
chip_gen: v6e
topology: v6e:2x2x1
jax: 0.10.0
libtpu: 0.0.40
codegen_flags: <defaults>
</compile_context>

<pallas_src>
import functools

import jax
import jax.numpy as jnp
from jax.experimental import pallas as pl
from jax.experimental.pallas import tpu as pltpu

EPS = 1e-5


# --------------------------------------------------------------------------- #
# Tiling helpers
# --------------------------------------------------------------------------- #
def _pad128(n: int) -> int:
    return max(128, ((n + 127) // 128) * 128)


def _pad8(n: int) -> int:
    return ((n + 7) // 8) * 8


def _choose_tiles(C: int, HW: int, target_bytes: int):
    """Pick (TC, THW) channel / spatial tile sizes.

    * TC is a multiple-of-8 exact divisor of C (or C itself when C % 8 != 0).
    * THW is HW itself, or an exact multiple-of-128 divisor of HW when even a
      minimal-TC full-HW block would exceed the per-block budget (keeps every
      store lane-dense and the reduction mask-free).
    * TC is capped so nct = C // TC >= 2 whenever possible, so the stats pass
      has a 'parallel' axis >= 2 for v7x megacore sharding.
    """
    if C % 8 == 0:
        c_cands = [t for t in range(8, C + 1, 8) if C % t == 0]
    else:
        c_cands = [C]
    tc_min = min(c_cands)

    thw = HW
    if tc_min * _pad128(HW) * 4 > target_bytes:
        hw_cands = [t for t in range(128, HW, 128)
                    if HW % t == 0 and tc_min * t * 4 <= target_bytes]
        if hw_cands:
            thw = max(hw_cands)
        # else: no lane-aligned exact divisor -> keep full HW; the caller
        # raises vmem_limit_bytes to match the actual block size.

    row_bytes = _pad128(thw) * 4
    fitting = [t for t in c_cands if t * row_bytes <= target_bytes]
    tc = max(fitting) if fitting else tc_min

    # v7x megacore: ensure >= 2 channel tiles whenever C allows it.
    smaller = [t for t in c_cands if t < C]
    if tc == C and smaller:
        tc = max(smaller)
    return tc, thw


def _vmem_limit(needed_bytes: int) -> int:
    # 1.5x headroom for compiler-internal scratch; floor 8 MiB; cap well below
    # v7x's 64 MiB physical VMEM.
    return int(min(max(int(needed_bytes * 1.5), 8 << 20), 48 << 20))


# --------------------------------------------------------------------------- #
# Kernels
# --------------------------------------------------------------------------- #
def _stats_kernel(x_ref, sum_ref, m2_ref, *, cnt):
    """Per-channel (sum, centered sum-of-squares) via Chan's parallel combine.

    Accumulators live in the resident (TC, 1) output blocks across the two
    reduction grid axes (N, HW-tiles).  Block-local means + Chan's combine
    avoid the E[x^2]-E[x]^2 catastrophic-cancellation risk.
    """
    r = pl.program_id(1) * pl.num_programs(2) + pl.program_id(2)  # reduction step

    x = x_ref[...]                                    # (TC, THW)
    bsum = jnp.sum(x, axis=1, keepdims=True)          # (TC, 1)
    bmean = bsum * (1.0 / cnt)
    d = x - bmean
    bm2 = jnp.sum(d * d, axis=1, keepdims=True)       # (TC, 1)

    @pl.when(r == 0)
    def _():
        sum_ref[...] = bsum
        m2_ref[...] = bm2

    @pl.when(r > 0)
    def _():
        cnt_f = jnp.float32(cnt)
        n_prev = r.astype(jnp.float32) * cnt_f
        mean_prev = sum_ref[...] / n_prev
        delta = bmean - mean_prev
        m2_ref[...] = (m2_ref[...] + bm2
                       + (delta * delta) * (n_prev * cnt_f / (n_prev + cnt_f)))
        sum_ref[...] = sum_ref[...] + bsum


def _apply_kernel(x_ref, r_ref, scale_ref, shift_ref, o_ref):
    # Per-channel scale/shift already fold mean, inv_std, gamma, beta.
    y = x_ref[...] * scale_ref[...] + shift_ref[...] + r_ref[...]
    o_ref[...] = jnp.maximum(y, 0.0)


# --------------------------------------------------------------------------- #
# Wrapper
# --------------------------------------------------------------------------- #
def bn_add_relu(x119, x112, gamma, beta, *, target_block_bytes=2 << 20):
    """x119, x112: (N, C, H, W) float32.  gamma, beta: (C,) float32."""
    N, C, H, W = x119.shape
    HW = H * W
    L = N * HW

    TC, THW = _choose_tiles(C, HW, target_block_bytes)
    nct = C // TC
    nhw = HW // THW

    in_block = TC * _pad128(THW) * 4             # one (TC, THW) f32 tile in VMEM
    acc_block = _pad8(TC) * 128 * 4              # one (TC, 1) f32 tile in VMEM
    total = N * C * HW

    # Free reshapes only — no transposes, layout stays NCHW.
    x3 = x119.reshape(N, C, HW).astype(jnp.float32)
    r3 = x112.reshape(N, C, HW).astype(jnp.float32)

    # ---------------- Pass 1: per-channel sum / centered sum-of-squares -------
    csum, cm2 = pl.pallas_call(
        functools.partial(_stats_kernel, cnt=THW),
        out_shape=(
            jax.ShapeDtypeStruct((C, 1), jnp.float32),
            jax.ShapeDtypeStruct((C, 1), jnp.float32),
        ),
        grid=(nct, N, nhw),                       # reduction axes (N, HW) last
        in_specs=[pl.BlockSpec((None, TC, THW), lambda c, n, h: (n, c, h))],
        out_specs=(
            pl.BlockSpec((TC, 1), lambda c, n, h: (c, 0)),
            pl.BlockSpec((TC, 1), lambda c, n, h: (c, 0)),
        ),
        compiler_params=pltpu.CompilerParams(
            dimension_semantics=("parallel", "arbitrary", "arbitrary"),
            vmem_limit_bytes=_vmem_limit(2 * in_block + 4 * acc_block),
        ),
        cost_estimate=pl.CostEstimate(
            flops=4 * total, transcendentals=0,
            bytes_accessed=4 * total + 8 * C),
    )(x3)

    # ------- Tiny C-sized glue: fold batch stats + affine into scale/shift ----
    mean = csum / L
    var = jnp.maximum(cm2 / L, 0.0)               # biased variance (training BN)
    inv_std = jax.lax.rsqrt(var + EPS)
    scale = gamma.reshape(C, 1).astype(jnp.float32) * inv_std
    shift = beta.reshape(C, 1).astype(jnp.float32) - mean * scale

    # ---------------- Pass 2: fused normalize + residual add + ReLU -----------
    # Channel axis outermost => the tiny (TC, 1) scale/shift blocks stay
    # resident across all inner (N, HW) steps instead of being re-DMA'd.
    # TODO(synk): optionally sweep pipeline_mode=pl.Buffered(3) on the x/r
    # streams and a VMEM-resident single-pass variant when the slab fits.
    out3 = pl.pallas_call(
        _apply_kernel,
        out_shape=jax.ShapeDtypeStruct((N, C, HW), jnp.float32),
        grid=(nct, N, nhw),
        in_specs=[
            pl.BlockSpec((None, TC, THW), lambda c, n, h: (n, c, h)),
            pl.BlockSpec((None, TC, THW), lambda c, n, h: (n, c, h)),
            pl.BlockSpec((TC, 1), lambda c, n, h: (c, 0)),
            pl.BlockSpec((TC, 1), lambda c, n, h: (c, 0)),
        ],
        out_specs=pl.BlockSpec((None, TC, THW), lambda c, n, h: (n, c, h)),
        compiler_params=pltpu.CompilerParams(
            dimension_semantics=("parallel", "parallel", "parallel"),
            vmem_limit_bytes=_vmem_limit(6 * in_block + 4 * acc_block),
        ),
        cost_estimate=pl.CostEstimate(
            flops=4 * total, transcendentals=0,
            bytes_accessed=12 * total + 8 * C),
    )(x3, r3, scale, shift)

    return out3.reshape(N, C, H, W)


# --------------------------------------------------------------------------- #
# Reference + test
# --------------------------------------------------------------------------- #
def reference(x119, x112, gamma, beta):
    mean = jnp.mean(x119, axis=(0, 2, 3), keepdims=True)
    var = jnp.mean((x119 - mean) ** 2, axis=(0, 2, 3), keepdims=True)
    y = (x119 - mean) * jax.lax.rsqrt(var + EPS)
    y = y * gamma.reshape(1, -1, 1, 1) + beta.reshape(1, -1, 1, 1)
    return jnp.maximum(y + x112, 0.0)


if __name__ == "__main__":
    # Small shapes consistent with the module's (N, C, H, W) = (1, 1024, 28, 28):
    # same spatial size, fewer channels, batch 2 to exercise the cross-block
    # stats combine.
    N, C, H, W = 2, 128, 28, 28
    key = jax.random.PRNGKey(0)
    k1, k2, k3, k4 = jax.random.split(key, 4)

    # Non-zero mean to exercise the numerically robust variance path.
    x119 = 2.0 * jax.random.normal(k1, (N, C, H, W), dtype=jnp.float32) + 3.0
    x112 = jax.random.normal(k2, (N, C, H, W), dtype=jnp.float32)
    # Deterministic nontrivial affine parameters (instead of PyTorch's 1/0 init).
    gamma = 1.0 + 0.1 * jax.random.normal(k3, (C,), dtype=jnp.float32)
    beta = 0.1 * jax.random.normal(k4, (C,), dtype=jnp.float32)

    out = jax.block_until_ready(bn_add_relu(x119, x112, gamma, beta))

    ref = reference(x119, x112, gamma, beta)
    assert out.shape == (N, C, H, W)
    assert jnp.allclose(out, ref, atol=1e-4, rtol=1e-4), "mismatch vs reference"

    print("KERNEL_OK")
</pallas_src>

<mosaic_0001>
module attributes {stable_mosaic.version = 11 : i64} {
  func.func @_stats_kernel(%arg0: i32, %arg1: i32, %arg2: i32, %arg3: memref<1x64x784xf32, #tpu.memory_space<vmem>>, %arg4: memref<64x1xf32, #tpu.memory_space<vmem>>, %arg5: memref<64x1xf32, #tpu.memory_space<vmem>>) attributes {dimension_semantics = [#tpu.dimension_semantics<parallel>, #tpu.dimension_semantics<arbitrary>, #tpu.dimension_semantics<arbitrary>], iteration_bounds = array<i64: 2, 2, 1>, scalar_prefetch = 0 : i64, scratch_operands = 0 : i64, tpu.core_type = #tpu.core_type<tc>, window_params = [{transform_indices = @transform_0, window_bounds = array<i64: 1, 64, 784>}, {transform_indices = @transform_1, window_bounds = array<i64: 64, 1>}, {transform_indices = @transform_2, window_bounds = array<i64: 64, 1>}]} {
    %c1_i32 = arith.constant 1 : i32
    %0 = arith.muli %arg1, %c1_i32 : i32
    %1 = arith.addi %0, %arg2 : i32
    %c0 = arith.constant 0 : index
    %c0_0 = arith.constant 0 : index
    %c0_1 = arith.constant 0 : index
    %2 = vector.load %arg3[%c0, %c0_0, %c0_1] : memref<1x64x784xf32, #tpu.memory_space<vmem>>, vector<1x64x784xf32>
    %3 = vector.shape_cast %2 : vector<1x64x784xf32> to vector<64x784xf32>
    %cst = arith.constant dense<0.000000e+00> : vector<64xf32>
    %4 = vector.multi_reduction <add>, %3, %cst [1] : vector<64x784xf32> to vector<64xf32>
    %5 = vector.shape_cast %4 : vector<64xf32> to vector<64x1xf32>
    %cst_2 = arith.constant 0.00127551018 : f32
    %6 = vector.broadcast %cst_2 : f32 to vector<64x1xf32>
    %7 = arith.mulf %5, %6 : vector<64x1xf32>
    %8 = vector.broadcast %7 : vector<64x1xf32> to vector<64x784xf32>
    %9 = arith.subf %3, %8 : vector<64x784xf32>
    %10 = arith.mulf %9, %9 : vector<64x784xf32>
    %cst_3 = arith.constant dense<0.000000e+00> : vector<64xf32>
    %11 = vector.multi_reduction <add>, %10, %cst_3 [1] : vector<64x784xf32> to vector<64xf32>
    %12 = vector.shape_cast %11 : vector<64xf32> to vector<64x1xf32>
    %c0_i32 = arith.constant 0 : i32
    %13 = arith.cmpi eq, %1, %c0_i32 : i32
    %14 = arith.extui %13 : i1 to i32
    %c0_i32_4 = arith.constant 0 : i32
    %15 = arith.cmpi ne, %14, %c0_i32_4 : i32
    scf.if %15 {
      %c0_7 = arith.constant 0 : index
      %c0_8 = arith.constant 0 : index
      %19 = vector.load %arg4[%c0_7, %c0_8] : memref<64x1xf32, #tpu.memory_space<vmem>>, vector<64x1xf32>
      tpu.vector_store %arg4[%c0_7, %c0_8], %5 {strides = array<i32>} : memref<64x1xf32, #tpu.memory_space<vmem>>, vector<64x1xf32>,
      %c0_9 = arith.constant 0 : index
      %c0_10 = arith.constant 0 : index
      %20 = vector.load %arg5[%c0_9, %c0_10] : memref<64x1xf32, #tpu.memory_space<vmem>>, vector<64x1xf32>
      tpu.vector_store %arg5[%c0_9, %c0_10], %12 {strides = array<i32>} : memref<64x1xf32, #tpu.memory_space<vmem>>, vector<64x1xf32>,
    } else {
    }
    %c0_i32_5 = arith.constant 0 : i32
    %16 = arith.cmpi sgt, %1, %c0_i32_5 : i32
    %17 = arith.extui %16 : i1 to i32
    %c0_i32_6 = arith.constant 0 : i32
    %18 = arith.cmpi ne, %17, %c0_i32_6 : i32
    scf.if %18 {
      %19 = arith.sitofp %1 : i32 to f32
      %cst_7 = arith.constant 7.840000e+02 : f32
      %20 = arith.mulf %19, %cst_7 : f32
      %c0_8 = arith.constant 0 : index
      %c0_9 = arith.constant 0 : index
      %21 = vector.load %arg4[%c0_8, %c0_9] : memref<64x1xf32, #tpu.memory_space<vmem>>, vector<64x1xf32>
      %22 = vector.broadcast %20 : f32 to vector<64x1xf32>
      %23 = arith.divf %21, %22 : vector<64x1xf32>
      %24 = arith.subf %7, %23 : vector<64x1xf32>
      %c0_10 = arith.constant 0 : index
      %c0_11 = arith.constant 0 : index
      %25 = vector.load %arg5[%c0_10, %c0_11] : memref<64x1xf32, #tpu.memory_space<vmem>>, vector<64x1xf32>
      %26 = arith.addf %25, %12 : vector<64x1xf32>
      %27 = arith.mulf %24, %24 : vector<64x1xf32>
      %cst_12 = arith.constant 7.840000e+02 : f32
      %28 = arith.mulf %20, %cst_12 : f32
      %cst_13 = arith.constant 7.840000e+02 : f32
      %29 = arith.addf %20, %cst_13 : f32
      %30 = arith.divf %28, %29 : f32
      %31 = vector.broadcast %30 : f32 to vector<64x1xf32>
      %32 = arith.mulf %27, %31 : vector<64x1xf32>
      %33 = arith.addf %26, %32 : vector<64x1xf32>
      %c0_14 = arith.constant 0 : index
      %c0_15 = arith.constant 0 : index
      %34 = vector.load %arg5[%c0_14, %c0_15] : memref<64x1xf32, #tpu.memory_space<vmem>>, vector<64x1xf32>
      tpu.vector_store %arg5[%c0_14, %c0_15], %33 {strides = array<i32>} : memref<64x1xf32, #tpu.memory_space<vmem>>, vector<64x1xf32>,
      %c0_16 = arith.constant 0 : index
      %c0_17 = arith.constant 0 : index
      %35 = vector.load %arg4[%c0_16, %c0_17] : memref<64x1xf32, #tpu.memory_space<vmem>>, vector<64x1xf32>
      %36 = arith.addf %35, %5 : vector<64x1xf32>
      %c0_18 = arith.constant 0 : index
      %c0_19 = arith.constant 0 : index
      %37 = vector.load %arg4[%c0_18, %c0_19] : memref<64x1xf32, #tpu.memory_space<vmem>>, vector<64x1xf32>
      tpu.vector_store %arg4[%c0_18, %c0_19], %36 {strides = array<i32>} : memref<64x1xf32, #tpu.memory_space<vmem>>, vector<64x1xf32>,
    } else {
    }
    return
  }
  func.func @transform_0(%arg0: i32, %arg1: i32, %arg2: i32) -> (i32, i32, i32) {
    %c0_i32 = arith.constant 0 : i32
    return %arg1, %arg0, %arg2 : i32, i32, i32
  }
  func.func @transform_1(%arg0: i32, %arg1: i32, %arg2: i32) -> (i32, i32) {
    %c0_i32 = arith.constant 0 : i32
    %c0_i32_0 = arith.constant 0 : i32
    return %arg0, %c0_i32 : i32, i32
  }
  func.func @transform_2(%arg0: i32, %arg1: i32, %arg2: i32) -> (i32, i32) {
    %c0_i32 = arith.constant 0 : i32
    %c0_i32_0 = arith.constant 0 : i32
    return %arg0, %c0_i32 : i32, i32
  }
}

</mosaic_0001>

<llo_original>
// kernel: tpu_custom_call.1
$region0: #{tpu_custom_call.1}
  #allocation0 [shape = 'u32[]', space=smem, size = 0x4, offset = 0x4, fixed_abs, tag = 'smem constant byte address 0x4 - core index']
  #allocation1 [shape = 'u32[144,128]{1,0:T(1,128)}', space=vmem, size = 0x12000, scoped, tag = 'internal scratch']
  %s0 = inlined_call_operand.vmem [shape: f32[2,128,784], index: 0, kind: input, shape index: {}]
  %s1 = inlined_call_operand.vmem [shape: f32[128,1], index: 1, kind: output, shape index: {0}]
  %s2 = inlined_call_operand.vmem [shape: f32[128,1], index: 2, kind: output, shape index: {1}]
  %3 = xla_tuple %s1, %s2
  %s4 = sld [smem:[#allocation0]]
  $region53: #{tpu_custom_call.1} parent=0
    _
  %s6 = ssub.s32 1, %s4
  %s7 = scalar_select 0, %s6, %s4
  loop: start=0, step=1, limit=6
  $region2: #{tpu_custom_call.1} parent=0 // loop_pre_header
    _
  $region3: #{tpu_custom_call.1} parent=0 // loop_header
    %s9 = sphi 0, %s13
    %p10 = scmp.ge.s32.totalorder %s9, 6
    %s16 = sphi 0, %s35
    %s17 = sphi 0, %s31
    %s18 = sphi 0, %s27
    %s19 = sphi 0, %s16
    %s20 = sphi 0, %s17
    %s21 = sphi 0, %s18
    %s22 = sphi 0, %s19
    %s23 = sphi 0, %s20
    %s24 = sphi 0, %s21
    %s42 = sphi 0, %s44
    %s45 = sphi 0, %s42
    %s46 = sphi 0, %s45
    %s62 = sphi 0, %s46
    %s68 = sphi 0, %s70
    %s71 = sphi 0, %s68
    %s72 = sphi 0, %s71
    %s88 = sphi 0, %s72
    %s94 = sphi 0, %s96
    %s97 = sphi 0, %s94
    %s98 = sphi 0, %s97
    %s114 = sphi 0, %s98
  $region4: #{tpu_custom_call.1} parent=0 // loop_header_branch
    %12 = sbr.rel (%p10) target = $region8
  $region5: #{tpu_custom_call.1} parent=0 // loop_body
    %s14 = ssub.s32 %s9, 1
    %s15 = ssub.s32 %s9, 2
    %s25 = sadd.s32 1, %s18
    %p26 = scmp.ge.s32.totalorder %s25, 1
    %s27 = scalar_select %p26, 0, %s25
    %s28 = sadd.s32 1, %s17
    %s29 = scalar_select %p26, %s28, %s17
    %p30 = scmp.ge.s32.totalorder %s29, 2
    %s31 = scalar_select %p30, 0, %s29
    %s32 = sadd.s32 1, %s16
    %s33 = scalar_select %p30, %s32, %s16
    %p34 = scmp.ge.s32.totalorder %s33, 2
    %s35 = scalar_select %p34, 0, %s33
    %s36 = ssub.s32 %s17, %s31
    %s37 = ssub.s32 %s16, %s35
    %s38 = sor.u32 %s36, %s37
    %s39 = ssub.s32 %s18, %s27
    %s40 = sor.u32 %s38, %s39
    %p41 = scmp.eq.s32.totalorder %s40, 0
    %s43 = sadd.s32 %s42, 1
    %s44 = scalar_select %p41, %s42, %s43
    %p47 = pneg %p41
    %p48 = scmp.eq.s32.totalorder %s9, 3
    %p49 = por %p47, %p48
    %p50 = scmp.ne.s32.totalorder %s42, %s45
    %p51 = scmp.eq.s32.totalorder %s9, 0
    %p52 = por %p50, %p51
    %p53 = scmp.ne.s32.totalorder %s42, %s45
    %p54 = scmp.eq.s32.totalorder %s14, 3
    %p55 = por %p53, %p54
    %p56 = scmp.ne.s32.totalorder %s45, %s46
    %p57 = scmp.eq.s32.totalorder %s14, 0
    %p58 = por %p56, %p57
    %p59 = scmp.ne.s32.totalorder %s45, %s46
    %p60 = scmp.eq.s32.totalorder %s15, 3
    %p61 = por %p59, %p60
    %p63 = scmp.ne.s32.totalorder %s46, %s62
    %p64 = scmp.eq.s32.totalorder %s15, 0
    %p65 = por %p63, %p64
    %s66 = ssub.s32 %s16, %s35
    %p67 = scmp.eq.s32.totalorder %s66, 0
    %s69 = sadd.s32 %s68, 1
    %s70 = scalar_select %p67, %s68, %s69
    %p73 = pneg %p67
    %p74 = scmp.eq.s32.totalorder %s9, 3
    %p75 = por %p73, %p74
    %p76 = scmp.ne.s32.totalorder %s68, %s71
    %p77 = scmp.eq.s32.totalorder %s9, 0
    %p78 = por %p76, %p77
    %p79 = scmp.ne.s32.totalorder %s68, %s71
    %p80 = scmp.eq.s32.totalorder %s14, 3
    %p81 = por %p79, %p80
    %p82 = scmp.ne.s32.totalorder %s71, %s72
    %p83 = scmp.eq.s32.totalorder %s14, 0
    %p84 = por %p82, %p83
    %p85 = scmp.ne.s32.totalorder %s71, %s72
    %p86 = scmp.eq.s32.totalorder %s15, 3
    %p87 = por %p85, %p86
    %p89 = scmp.ne.s32.totalorder %s72, %s88
    %p90 = scmp.eq.s32.totalorder %s15, 0
    %p91 = por %p89, %p90
    %s92 = ssub.s32 %s16, %s35
    %p93 = scmp.eq.s32.totalorder %s92, 0
    %s95 = sadd.s32 %s94, 1
    %s96 = scalar_select %p93, %s94, %s95
    %p99 = pneg %p93
    %p100 = scmp.eq.s32.totalorder %s9, 3
    %p101 = por %p99, %p100
    %p102 = scmp.ne.s32.totalorder %s94, %s97
    %p103 = scmp.eq.s32.totalorder %s9, 0
    %p104 = por %p102, %p103
    %p105 = scmp.ne.s32.totalorder %s94, %s97
    %p106 = scmp.eq.s32.totalorder %s14, 3
    %p107 = por %p105, %p106
    %p108 = scmp.ne.s32.totalorder %s97, %s98
    %p109 = scmp.eq.s32.totalorder %s14, 0
    %p110 = por %p108, %p109
    %p111 = scmp.ne.s32.totalorder %s97, %s98
    %p112 = scmp.eq.s32.totalorder %s15, 3
    %p113 = por %p111, %p112
    %p115 = scmp.ne.s32.totalorder %s98, %s114
    %p116 = scmp.eq.s32.totalorder %s15, 0
    %p117 = por %p115, %p116
    %p118 = scmp.le.s32.totalorder 1, %s9
    %p119 = scmp.lt.s32.totalorder %s9, 5
    %p120 = pnand %p118, %p119
    %p121 = pneg %p120
    // Predicated region
    $region9: #{tpu_custom_call.1} parent=5 // pred_check
      _
    $region10: #{tpu_custom_call.1} parent=5 // pred_check_branch
      %123 = sbr.rel (%p120) target = $region12
    $region11: #{tpu_custom_call.1} parent=5 // pred_region
      %s124 = ssub.s32 %s9, 1
    $region12: #{tpu_custom_call.1} parent=5 // pred_fallthru
      _
    %p125 = scmp.lt.s32.totalorder %s9, 4
    // Predicated region
    $region13: #{tpu_custom_call.1} parent=5 // pred_check
      %p126 = pneg %p125
    $region14: #{tpu_custom_call.1} parent=5 // pred_check_branch
      %128 = sbr.rel (%p126) target = $region16
    $region15: #{tpu_custom_call.1} parent=5 // pred_region
      // Predicated region
      $region17: #{tpu_custom_call.1} parent=15 // pred_check
        %p129 = pneg %p52
      $region18: #{tpu_custom_call.1} parent=15 // pred_check_branch
        %131 = sbr.rel (%p129) target = $region20
      $region19: #{tpu_custom_call.1} parent=15 // pred_region
        %s132 = smul.u32 8, %s16
        %s133 = smul.u32 7, %s18
        %p134 = scmp.lt.s32.totalorder %s17, 1
        %s135 = scalar_select %p134, %s17, 1
        %p136 = scmp.lt.s32.totalorder %s132, 15
        %s137 = scalar_select %p136, %s132, 15
        %p138 = scmp.lt.s32.totalorder %s133, 6
        %s139 = scalar_select %p138, %s133, 6
        %s140 = smul.addr %s137, 7
        %s141 = sadd.s32 %s139, %s140
        %s142 = smul.addr %s135, 112
        %s143 = sadd.s32 %s141, %s142
        %s144 = smul.addr %s143, 8
        %s145 = scalar_lea.vmem %s0, %s144
        %s146 = smul.u32 8, %s16
        %s147 = smul.u32 7, %s18
      $region20: #{tpu_custom_call.1} parent=15 // pred_fallthru
        _
    $region16: #{tpu_custom_call.1} parent=5 // pred_fallthru
      _
    %p148 = scmp.le.s32.totalorder 1, %s9
    %p149 = scmp.lt.s32.totalorder %s9, 5
    %p150 = pnand %p148, %p149
    %p151 = pneg %p150
    // Predicated region
    $region21: #{tpu_custom_call.1} parent=5 // pred_check
      _
    $region22: #{tpu_custom_call.1} parent=5 // pred_check_branch
      %153 = sbr.rel (%p150) target = $region24
    $region23: #{tpu_custom_call.1} parent=5 // pred_region
      %s154 = ssub.s32 %s9, 1
      %s155 = smul.u32 8, %s19
      %s156 = smul.u32 7, %s21
      %p157 = scmp.lt.s32.totalorder %s20, 1
      %s158 = scalar_select %p157, %s20, 1
      %p159 = scmp.lt.s32.totalorder %s155, 15
      %s160 = scalar_select %p159, %s155, 15
      %p161 = scmp.lt.s32.totalorder %s156, 6
      %s162 = scalar_select %p161, %s156, 6
      %s163 = smul.addr %s160, 7
      %s164 = sadd.s32 %s162, %s163
      %s165 = smul.addr %s158, 112
      %s166 = sadd.s32 %s164, %s165
      %s167 = smul.addr %s166, 8
      %s168 = scalar_lea.vmem %s0, %s167
      %p169 = pneg %p58
      %p170 = pneg %p55
      %p171 = pneg %p84
      %p172 = pneg %p81
      %s173 = smul.u32 8, %s19
      %p174 = scmp.lt.s32.totalorder %s173, 15
      %s175 = scalar_select %p174, %s173, 15
      %s176 = smul.addr %s175, 8
      %s177 = scalar_lea.vmem %s1, %s176
      %p178 = pneg %p110
      %p179 = pneg %p107
      %s180 = smul.u32 8, %s19
      %p181 = scmp.lt.s32.totalorder %s180, 15
      %s182 = scalar_select %p181, %s180, 15
      %s183 = smul.addr %s182, 8
      %s184 = scalar_lea.vmem %s2, %s183
      %s185 = smul.u32 8, %s19
      %s186 = smul.u32 7, %s21
      %p187 = scmp.lt.s32.totalorder %s20, 1
      %s188 = scalar_select %p187, %s20, 1
      %p189 = scmp.lt.s32.totalorder %s185, 15
      %s190 = scalar_select %p189, %s185, 15
      %p191 = scmp.lt.s32.totalorder %s186, 6
      %s192 = scalar_select %p191, %s186, 6
      %s193 = smul.addr %s190, 7
      %s194 = sadd.s32 %s192, %s193
      %s195 = smul.addr %s188, 112
      %s196 = sadd.s32 %s194, %s195
      %s197 = smul.addr %s196, 8
      %s198 = scalar_lea.vmem %s0, %s197
      %s199 = smul.u32 8, %s19
      %s200 = smul.u32 7, %s21
      %s201 = smul.u32 8, %s19
      %p202 = scmp.lt.s32.totalorder %s201, 15
      %s203 = scalar_select %p202, %s201, 15
      %s204 = smul.addr %s203, 8
      %s205 = scalar_lea.vmem %s1, %s204
      %s206 = smul.u32 8, %s19
      %s207 = smul.u32 8, %s19
      %p208 = scmp.lt.s32.totalorder %s207, 15
      %s209 = scalar_select %p208, %s207, 15
      %s210 = smul.addr %s209, 8
      %s211 = scalar_lea.vmem %s2, %s210
      %s212 = smul.u32 8, %s19
      %s213 = sadd.s32 %s20, %s21
      %v214 = vld [vmem:[%s198] sm:$0xff]
      %v215 = vld [vmem:[%s198 + $0x8] sm:$0xff]
      %v216 = vld [vmem:[%s198 + $0x10] sm:$0xff]
      %v217 = vld [vmem:[%s198 + $0x18] sm:$0xff]
      %v218 = vld [vmem:[%s198 + $0x20] sm:$0xff]
      %v219 = vld [vmem:[%s198 + $0x28] sm:$0xff]
      %v220 = vld [vmem:[%s198 + $0x30] sm:$0xff]
      %v221 = vld [vmem:[%s198 + $0x38] sm:$0xff]
      %v222 = vld [vmem:[%s198 + $0x40] sm:$0xff]
      %v223 = vld [vmem:[%s198 + $0x48] sm:$0xff]
      %v224 = vld [vmem:[%s198 + $0x50] sm:$0xff]
      %v225 = vld [vmem:[%s198 + $0x58] sm:$0xff]
      %v226 = vld [vmem:[%s198 + $0x60] sm:$0xff]
      %v227 = vld [vmem:[%s198 + $0x68] sm:$0xff]
      %v228 = vld [vmem:[%s198 + $0x70] sm:$0xff]
      %v229 = vld [vmem:[%s198 + $0x78] sm:$0xff]
      %v230 = vld [vmem:[%s198 + $0x80] sm:$0xff]
      %v231 = vld [vmem:[%s198 + $0x88] sm:$0xff]
      %v232 = vld [vmem:[%s198 + $0x90] sm:$0xff]
      %v233 = vld [vmem:[%s198 + $0x98] sm:$0xff]
      %v234 = vld [vmem:[%s198 + $0xa0] sm:$0xff]
      %v235 = vld [vmem:[%s198 + $0xa8] sm:$0xff]
      %v236 = vld [vmem:[%s198 + $0xb0] sm:$0xff]
      %v237 = vld [vmem:[%s198 + $0xb8] sm:$0xff]
      %v238 = vld [vmem:[%s198 + $0xc0] sm:$0xff]
      %v239 = vld [vmem:[%s198 + $0xc8] sm:$0xff]
      %v240 = vld [vmem:[%s198 + $0xd0] sm:$0xff]
      %v241 = vld [vmem:[%s198 + $0xd8] sm:$0xff]
      %v242 = vld [vmem:[%s198 + $0xe0] sm:$0xff]
      %v243 = vld [vmem:[%s198 + $0xe8] sm:$0xff]
      %v244 = vld [vmem:[%s198 + $0xf0] sm:$0xff]
      %v245 = vld [vmem:[%s198 + $0xf8] sm:$0xff]
      %v246 = vld [vmem:[%s198 + $0x100] sm:$0xff]
      %v247 = vld [vmem:[%s198 + $0x108] sm:$0xff]
      %v248 = vld [vmem:[%s198 + $0x110] sm:$0xff]
      %v249 = vld [vmem:[%s198 + $0x118] sm:$0xff]
      %v250 = vld [vmem:[%s198 + $0x120] sm:$0xff]
      %v251 = vld [vmem:[%s198 + $0x128] sm:$0xff]
      %v252 = vld [vmem:[%s198 + $0x130] sm:$0xff]
      %v253 = vld [vmem:[%s198 + $0x138] sm:$0xff]
      %v254 = vld [vmem:[%s198 + $0x140] sm:$0xff]
      %v255 = vld [vmem:[%s198 + $0x148] sm:$0xff]
      %v256 = vld [vmem:[%s198 + $0x150] sm:$0xff]
      %v257 = vld [vmem:[%s198 + $0x158] sm:$0xff]
      %v258 = vld [vmem:[%s198 + $0x160] sm:$0xff]
      %v259 = vld [vmem:[%s198 + $0x168] sm:$0xff]
      %v260 = vld [vmem:[%s198 + $0x170] sm:$0xff]
      %v261 = vld [vmem:[%s198 + $0x178] sm:$0xff]
      %v262 = vld [vmem:[%s198 + $0x180] sm:$0xff]
      %v263 = vld [vmem:[%s198 + $0x188] sm:$0xff]
      %v264 = vld [vmem:[%s198 + $0x190] sm:$0xff]
      %v265 = vld [vmem:[%s198 + $0x198] sm:$0xff]
      %v266 = vld [vmem:[%s198 + $0x1a0] sm:$0xff]
      %v267 = vld [vmem:[%s198 + $0x1a8] sm:$0xff]
      %v268 = vld [vmem:[%s198 + $0x1b0] sm:$0xff]
      %v269 = vld [vmem:[%s198 + $0x1b8] sm:$0xff]
      %v270 = vadd.f32 %v214, %v215
      %v271 = vadd.f32 %v270, %v216
      %v272 = vadd.f32 %v271, %v217
      %v273 = vadd.f32 %v272, %v218
      %v274 = vadd.f32 %v273, %v219
      %vm275 = vcmask 130048
      %v276 = vsel %vm275, %v220, 0.0
      %v277 = vadd.f32 %v274, %v276
      %278 = vadd.xlane.f32.xlu0 %v277
      %v279 = vpop.xlane.xlu0 %278
      %v280 = vadd.f32 %v221, %v222
      %v281 = vadd.f32 %v280, %v223
      %v282 = vadd.f32 %v281, %v224
      %v283 = vadd.f32 %v282, %v225
      %v284 = vadd.f32 %v283, %v226
      %v285 = vsel %vm275, %v227, 0.0
      %v286 = vadd.f32 %v284, %v285
      %287 = vadd.xlane.f32.xlu0 %v286
      %v288 = vpop.xlane.xlu0 %287
      %v289 = vadd.f32 %v228, %v229
      %v290 = vadd.f32 %v289, %v230
      %v291 = vadd.f32 %v290, %v231
      %v292 = vadd.f32 %v291, %v232
      %v293 = vadd.f32 %v292, %v233
      %v294 = vsel %vm275, %v234, 0.0
      %v295 = vadd.f32 %v293, %v294
      %296 = vadd.xlane.f32.xlu0 %v295
      %v297 = vpop.xlane.xlu0 %296
      %v298 = vadd.f32 %v235, %v236
      %v299 = vadd.f32 %v298, %v237
      %v300 = vadd.f32 %v299, %v238
      %v301 = vadd.f32 %v300, %v239
      %v302 = vadd.f32 %v301, %v240
      %v303 = vsel %vm275, %v241, 0.0
      %v304 = vadd.f32 %v302, %v303
      %305 = vadd.xlane.f32.xlu0 %v304
      %v306 = vpop.xlane.xlu0 %305
      %v307 = vadd.f32 %v242, %v243
      %v308 = vadd.f32 %v307, %v244
      %v309 = vadd.f32 %v308, %v245
      %v310 = vadd.f32 %v309, %v246
      %v311 = vadd.f32 %v310, %v247
      %v312 = vsel %vm275, %v248, 0.0
      %v313 = vadd.f32 %v311, %v312
      %314 = vadd.xlane.f32.xlu0 %v313
      %v315 = vpop.xlane.xlu0 %314
      %v316 = vadd.f32 %v249, %v250
      %v317 = vadd.f32 %v316, %v251
      %v318 = vadd.f32 %v317, %v252
      %v319 = vadd.f32 %v318, %v253
      %v320 = vadd.f32 %v319, %v254
      %v321 = vsel %vm275, %v255, 0.0
      %v322 = vadd.f32 %v320, %v321
      %323 = vadd.xlane.f32.xlu0 %v322
      %v324 = vpop.xlane.xlu0 %323
      %v325 = vadd.f32 %v256, %v257
      %v326 = vadd.f32 %v325, %v258
      %v327 = vadd.f32 %v326, %v259
      %v328 = vadd.f32 %v327, %v260
      %v329 = vadd.f32 %v328, %v261
      %v330 = vsel %vm275, %v262, 0.0
      %v331 = vadd.f32 %v329, %v330
      %332 = vadd.xlane.f32.xlu0 %v331
      %v333 = vpop.xlane.xlu0 %332
      %v334 = vadd.f32 %v263, %v264
      %v335 = vadd.f32 %v334, %v265
      %v336 = vadd.f32 %v335, %v266
      %v337 = vadd.f32 %v336, %v267
      %v338 = vadd.f32 %v337, %v268
      %v339 = vsel %vm275, %v269, 0.0
      %v340 = vadd.f32 %v338, %v339
      %341 = vadd.xlane.f32.xlu0 %v340
      %v342 = vpop.xlane.xlu0 %341
      %v343 = vmul.f32 %v279, 0.0012755102
      %v344 = vmul.f32 %v288, 0.0012755102
      %v345 = vmul.f32 %v297, 0.0012755102
      %v346 = vmul.f32 %v306, 0.0012755102
      %v347 = vmul.f32 %v315, 0.0012755102
      %v348 = vmul.f32 %v324, 0.0012755102
      %v349 = vmul.f32 %v333, 0.0012755102
      %v350 = vmul.f32 %v342, 0.0012755102
      %v351 = vsub.f32 %v214, %v343
      %v352 = vsub.f32 %v215, %v343
      %v353 = vsub.f32 %v216, %v343
      %v354 = vsub.f32 %v217, %v343
      %v355 = vsub.f32 %v218, %v343
      %v356 = vsub.f32 %v219, %v343
      %v357 = vsub.f32 %v220, %v343
      %v358 = vsub.f32 %v221, %v344
      %v359 = vsub.f32 %v222, %v344
      %v360 = vsub.f32 %v223, %v344
      %v361 = vsub.f32 %v224, %v344
      %v362 = vsub.f32 %v225, %v344
      %v363 = vsub.f32 %v226, %v344
      %v364 = vsub.f32 %v227, %v344
      %v365 = vsub.f32 %v228, %v345
      %v366 = vsub.f32 %v229, %v345
      %v367 = vsub.f32 %v230, %v345
      %v368 = vsub.f32 %v231, %v345
      %v369 = vsub.f32 %v232, %v345
      %v370 = vsub.f32 %v233, %v345
      %v371 = vsub.f32 %v234, %v345
      %v372 = vsub.f32 %v235, %v346
      %v373 = vsub.f32 %v236, %v346
      %v374 = vsub.f32 %v237, %v346
      %v375 = vsub.f32 %v238, %v346
      %v376 = vsub.f32 %v239, %v346
      %v377 = vsub.f32 %v240, %v346
      %v378 = vsub.f32 %v241, %v346
      %v379 = vsub.f32 %v242, %v347
      %v380 = vsub.f32 %v243, %v347
      %v381 = vsub.f32 %v244, %v347
      %v382 = vsub.f32 %v245, %v347
      %v383 = vsub.f32 %v246, %v347
      %v384 = vsub.f32 %v247, %v347
      %v385 = vsub.f32 %v248, %v347
      %v386 = vsub.f32 %v249, %v348
      %v387 = vsub.f32 %v250, %v348
      %v388 = vsub.f32 %v251, %v348
      %v389 = vsub.f32 %v252, %v348
      %v390 = vsub.f32 %v253, %v348
      %v391 = vsub.f32 %v254, %v348
      %v392 = vsub.f32 %v255, %v348
      %v393 = vsub.f32 %v256, %v349
      %v394 = vsub.f32 %v257, %v349
      %v395 = vsub.f32 %v258, %v349
      %v396 = vsub.f32 %v259, %v349
      %v397 = vsub.f32 %v260, %v349
      %v398 = vsub.f32 %v261, %v349
      %v399 = vsub.f32 %v262, %v349
      %v400 = vsub.f32 %v263, %v350
      %v401 = vsub.f32 %v264, %v350
      %v402 = vsub.f32 %v265, %v350
      %v403 = vsub.f32 %v266, %v350
      %v404 = vsub.f32 %v267, %v350
      %v405 = vsub.f32 %v268, %v350
      %v406 = vsub.f32 %v269, %v350
      %v407 = vmul.f32 %v351, %v351
      %v408 = vmul.f32 %v352, %v352
      %v409 = vmul.f32 %v353, %v353
      %v410 = vmul.f32 %v354, %v354
      %v411 = vmul.f32 %v355, %v355
      %v412 = vmul.f32 %v356, %v356
      %v413 = vmul.f32 %v357, %v357
      %v414 = vmul.f32 %v358, %v358
      %v415 = vmul.f32 %v359, %v359
      %v416 = vmul.f32 %v360, %v360
      %v417 = vmul.f32 %v361, %v361
      %v418 = vmul.f32 %v362, %v362
      %v419 = vmul.f32 %v363, %v363
      %v420 = vmul.f32 %v364, %v364
      %v421 = vmul.f32 %v365, %v365
      %v422 = vmul.f32 %v366, %v366
      %v423 = vmul.f32 %v367, %v367
      %v424 = vmul.f32 %v368, %v368
      %v425 = vmul.f32 %v369, %v369
      %v426 = vmul.f32 %v370, %v370
      %v427 = vmul.f32 %v371, %v371
      %v428 = vmul.f32 %v372, %v372
      %v429 = vmul.f32 %v373, %v373
      %v430 = vmul.f32 %v374, %v374
      %v431 = vmul.f32 %v375, %v375
      %v432 = vmul.f32 %v376, %v376
      %v433 = vmul.f32 %v377, %v377
      %v434 = vmul.f32 %v378, %v378
      %v435 = vmul.f32 %v379, %v379
      %v436 = vmul.f32 %v380, %v380
      %v437 = vmul.f32 %v381, %v381
      %v438 = vmul.f32 %v382, %v382
      %v439 = vmul.f32 %v383, %v383
      %v440 = vmul.f32 %v384, %v384
      %v441 = vmul.f32 %v385, %v385
      %v442 = vmul.f32 %v386, %v386
      %v443 = vmul.f32 %v387, %v387
      %v444 = vmul.f32 %v388, %v388
      %v445 = vmul.f32 %v389, %v389
      %v446 = vmul.f32 %v390, %v390
      %v447 = vmul.f32 %v391, %v391
      %v448 = vmul.f32 %v392, %v392
      %v449 = vmul.f32 %v393, %v393
      %v450 = vmul.f32 %v394, %v394
      %v451 = vmul.f32 %v395, %v395
      %v452 = vmul.f32 %v396, %v396
      %v453 = vmul.f32 %v397, %v397
      %v454 = vmul.f32 %v398, %v398
      %v455 = vmul.f32 %v399, %v399
      %v456 = vmul.f32 %v400, %v400
      %v457 = vmul.f32 %v401, %v401
      %v458 = vmul.f32 %v402, %v402
      %v459 = vmul.f32 %v403, %v403
      %v460 = vmul.f32 %v404, %v404
      %v461 = vmul.f32 %v405, %v405
      %v462 = vmul.f32 %v406, %v406
      %v463 = vadd.f32 %v407, %v408
      %v464 = vadd.f32 %v463, %v409
      %v465 = vadd.f32 %v464, %v410
      %v466 = vadd.f32 %v465, %v411
      %v467 = vadd.f32 %v466, %v412
      %v468 = vsel %vm275, %v413, 0.0
      %v469 = vadd.f32 %v467, %v468
      %470 = vadd.xlane.f32.xlu0 %v469
      %v471 = vpop.xlane.xlu0 %470
      %v472 = vadd.f32 %v414, %v415
      %v473 = vadd.f32 %v472, %v416
      %v474 = vadd.f32 %v473, %v417
      %v475 = vadd.f32 %v474, %v418
      %v476 = vadd.f32 %v475, %v419
      %v477 = vsel %vm275, %v420, 0.0
      %v478 = vadd.f32 %v476, %v477
      %479 = vadd.xlane.f32.xlu0 %v478
      %v480 = vpop.xlane.xlu0 %479
      %v481 = vadd.f32 %v421, %v422
      %v482 = vadd.f32 %v481, %v423
      %v483 = vadd.f32 %v482, %v424
      %v484 = vadd.f32 %v483, %v425
      %v485 = vadd.f32 %v484, %v426
      %v486 = vsel %vm275, %v427, 0.0
      %v487 = vadd.f32 %v485, %v486
      %488 = vadd.xlane.f32.xlu0 %v487
      %v489 = vpop.xlane.xlu0 %488
      %v490 = vadd.f32 %v428, %v429
      %v491 = vadd.f32 %v490, %v430
      %v492 = vadd.f32 %v491, %v431
      %v493 = vadd.f32 %v492, %v432
      %v494 = vadd.f32 %v493, %v433
      %v495 = vsel %vm275, %v434, 0.0
      %v496 = vadd.f32 %v494, %v495
      %497 = vadd.xlane.f32.xlu0 %v496
      %v498 = vpop.xlane.xlu0 %497
      %v499 = vadd.f32 %v435, %v436
      %v500 = vadd.f32 %v499, %v437
      %v501 = vadd.f32 %v500, %v438
      %v502 = vadd.f32 %v501, %v439
      %v503 = vadd.f32 %v502, %v440
      %v504 = vsel %vm275, %v441, 0.0
      %v505 = vadd.f32 %v503, %v504
      %506 = vadd.xlane.f32.xlu0 %v505
      %v507 = vpop.xlane.xlu0 %506
      %v508 = vadd.f32 %v442, %v443
      %v509 = vadd.f32 %v508, %v444
      %v510 = vadd.f32 %v509, %v445
      %v511 = vadd.f32 %v510, %v446
      %v512 = vadd.f32 %v511, %v447
      %v513 = vsel %vm275, %v448, 0.0
      %v514 = vadd.f32 %v512, %v513
      %515 = vadd.xlane.f32.xlu0 %v514
      %v516 = vpop.xlane.xlu0 %515
      %v517 = vadd.f32 %v449, %v450
      %v518 = vadd.f32 %v517, %v451
      %v519 = vadd.f32 %v518, %v452
      %v520 = vadd.f32 %v519, %v453
      %v521 = vadd.f32 %v520, %v454
      %v522 = vsel %vm275, %v455, 0.0
      %v523 = vadd.f32 %v521, %v522
      %524 = vadd.xlane.f32.xlu0 %v523
      %v525 = vpop.xlane.xlu0 %524
      %v526 = vadd.f32 %v456, %v457
      %v527 = vadd.f32 %v526, %v458
      %v528 = vadd.f32 %v527, %v459
      %v529 = vadd.f32 %v528, %v460
      %v530 = vadd.f32 %v529, %v461
      %v531 = vsel %vm275, %v462, 0.0
      %v532 = vadd.f32 %v530, %v531
      %533 = vadd.xlane.f32.xlu0 %v532
      %v534 = vpop.xlane.xlu0 %533
      %p535 = scmp.eq.s32.totalorder %s213, 0
      // Predicated region
      $region25: #{tpu_custom_call.1} parent=23 // pred_check
        %p536 = pneg %p535
      $region26: #{tpu_custom_call.1} parent=23 // pred_check_branch
        %538 = sbr.rel (%p536) target = $region28
      $region27: #{tpu_custom_call.1} parent=23 // pred_region
        %vm539 = vcmask 7168
        %540 = vst.msk [vmem:[%s205] sm:$0xff] %vm539, %v279
        %541 = vst.msk [vmem:[%s205 + $0x8] sm:$0xff] %vm539, %v288
        %542 = vst.msk [vmem:[%s205 + $0x10] sm:$0xff] %vm539, %v297
        %543 = vst.msk [vmem:[%s205 + $0x18] sm:$0xff] %vm539, %v306
        %544 = vst.msk [vmem:[%s205 + $0x20] sm:$0xff] %vm539, %v315
        %545 = vst.msk [vmem:[%s205 + $0x28] sm:$0xff] %vm539, %v324
        %546 = vst.msk [vmem:[%s205 + $0x30] sm:$0xff] %vm539, %v333
        %547 = vst.msk [vmem:[%s205 + $0x38] sm:$0xff] %vm539, %v342
        %548 = vst.msk [vmem:[%s211] sm:$0xff] %vm539, %v471
        %549 = vst.msk [vmem:[%s211 + $0x8] sm:$0xff] %vm539, %v480
        %550 = vst.msk [vmem:[%s211 + $0x10] sm:$0xff] %vm539, %v489
        %551 = vst.msk [vmem:[%s211 + $0x18] sm:$0xff] %vm539, %v498
        %552 = vst.msk [vmem:[%s211 + $0x20] sm:$0xff] %vm539, %v507
        %553 = vst.msk [vmem:[%s211 + $0x28] sm:$0xff] %vm539, %v516
        %554 = vst.msk [vmem:[%s211 + $0x30] sm:$0xff] %vm539, %v525
        %555 = vst.msk [vmem:[%s211 + $0x38] sm:$0xff] %vm539, %v534
      $region28: #{tpu_custom_call.1} parent=23 // pred_fallthru
        _
      %p556 = scmp.gt.s32.totalorder %s213, 0
      // Predicated region
      $region29: #{tpu_custom_call.1} parent=23 // pred_check
        %p557 = pneg %p556
      $region30: #{tpu_custom_call.1} parent=23 // pred_check_branch
        %559 = sbr.rel (%p557) target = $region32
      $region31: #{tpu_custom_call.1} parent=23 // pred_region
        %s560 = scvt.s32.f32 %s213
        %s561 = smul.f32 %s560, 784.0
        %v562 = vld [vmem:[%s205] sm:$0xff]
        %v563 = vld [vmem:[%s205 + $0x8] sm:$0xff]
        %v564 = vld [vmem:[%s205 + $0x10] sm:$0xff]
        %v565 = vld [vmem:[%s205 + $0x18] sm:$0xff]
        %v566 = vld [vmem:[%s205 + $0x20] sm:$0xff]
        %v567 = vld [vmem:[%s205 + $0x28] sm:$0xff]
        %v568 = vld [vmem:[%s205 + $0x30] sm:$0xff]
        %v569 = vld [vmem:[%s205 + $0x38] sm:$0xff]
        %v570 = vstv %s561
        %v571 = vrcp.pop %v570
        %v572 = vmul.f32 %v562, %v571
        %v573 = vmul.f32 %v563, %v571
        %v574 = vmul.f32 %v564, %v571
        %v575 = vmul.f32 %v565, %v571
        %v576 = vmul.f32 %v566, %v571
        %v577 = vmul.f32 %v567, %v571
        %v578 = vmul.f32 %v568, %v571
        %v579 = vmul.f32 %v569, %v571
        %v580 = vsub.f32 %v343, %v572
        %v581 = vsub.f32 %v344, %v573
        %v582 = vsub.f32 %v345, %v574
        %v583 = vsub.f32 %v346, %v575
        %v584 = vsub.f32 %v347, %v576
        %v585 = vsub.f32 %v348, %v577
        %v586 = vsub.f32 %v349, %v578
        %v587 = vsub.f32 %v350, %v579
        %v588 = vld [vmem:[%s211] sm:$0xff]
        %v589 = vld [vmem:[%s211 + $0x8] sm:$0xff]
        %v590 = vld [vmem:[%s211 + $0x10] sm:$0xff]
        %v591 = vld [vmem:[%s211 + $0x18] sm:$0xff]
        %v592 = vld [vmem:[%s211 + $0x20] sm:$0xff]
        %v593 = vld [vmem:[%s211 + $0x28] sm:$0xff]
        %v594 = vld [vmem:[%s211 + $0x30] sm:$0xff]
        %v595 = vld [vmem:[%s211 + $0x38] sm:$0xff]
        %v596 = vadd.f32 %v588, %v471
        %v597 = vadd.f32 %v589, %v480
        %v598 = vadd.f32 %v590, %v489
        %v599 = vadd.f32 %v591, %v498
        %v600 = vadd.f32 %v592, %v507
        %v601 = vadd.f32 %v593, %v516
        %v602 = vadd.f32 %v594, %v525
        %v603 = vadd.f32 %v595, %v534
        %v604 = vmul.f32 %v580, %v580
        %v605 = vmul.f32 %v581, %v581
        %v606 = vmul.f32 %v582, %v582
        %v607 = vmul.f32 %v583, %v583
        %v608 = vmul.f32 %v584, %v584
        %v609 = vmul.f32 %v585, %v585
        %v610 = vmul.f32 %v586, %v586
        %v611 = vmul.f32 %v587, %v587
        %s612 = smul.f32 %s561, 784.0
        %s613 = sadd.f32 %s561, 784.0
        %v614 = vstv %s613
        %v615 = vrcp.pop %v614
        %s616 = vtos %v615
        %s617 = smul.f32 %s612, %s616
        %v618 = vstv %s617
        %v619 = vmul.f32 %v604, %v618
        %v620 = vmul.f32 %v605, %v618
        %v621 = vmul.f32 %v606, %v618
        %v622 = vmul.f32 %v607, %v618
        %v623 = vmul.f32 %v608, %v618
        %v624 = vmul.f32 %v609, %v618
        %v625 = vmul.f32 %v610, %v618
        %v626 = vmul.f32 %v611, %v618
        %v627 = vadd.f32 %v596, %v619
        %v628 = vadd.f32 %v597, %v620
        %v629 = vadd.f32 %v598, %v621
        %v630 = vadd.f32 %v599, %v622
        %v631 = vadd.f32 %v600, %v623
        %v632 = vadd.f32 %v601, %v624
        %v633 = vadd.f32 %v602, %v625
        %v634 = vadd.f32 %v603, %v626
        %vm635 = vcmask 7168
        %636 = vst.msk [vmem:[%s211] sm:$0xff] %vm635, %v627
        %637 = vst.msk [vmem:[%s211 + $0x8] sm:$0xff] %vm635, %v628
        %638 = vst.msk [vmem:[%s211 + $0x10] sm:$0xff] %vm635, %v629
        %639 = vst.msk [vmem:[%s211 + $0x18] sm:$0xff] %vm635, %v630
        %640 = vst.msk [vmem:[%s211 + $0x20] sm:$0xff] %vm635, %v631
        %641 = vst.msk [vmem:[%s211 + $0x28] sm:$0xff] %vm635, %v632
        %642 = vst.msk [vmem:[%s211 + $0x30] sm:$0xff] %vm635, %v633
        %643 = vst.msk [vmem:[%s211 + $0x38] sm:$0xff] %vm635, %v634
        %v644 = vld [vmem:[%s205] sm:$0xff]
        %v645 = vld [vmem:[%s205 + $0x8] sm:$0xff]
        %v646 = vld [vmem:[%s205 + $0x10] sm:$0xff]
        %v647 = vld [vmem:[%s205 + $0x18] sm:$0xff]
        %v648 = vld [vmem:[%s205 + $0x20] sm:$0xff]
        %v649 = vld [vmem:[%s205 + $0x28] sm:$0xff]
        %v650 = vld [vmem:[%s205 + $0x30] sm:$0xff]
        %v651 = vld [vmem:[%s205 + $0x38] sm:$0xff]
        %v652 = vadd.f32 %v644, %v279
        %v653 = vadd.f32 %v645, %v288
        %v654 = vadd.f32 %v646, %v297
        %v655 = vadd.f32 %v647, %v306
        %v656 = vadd.f32 %v648, %v315
        %v657 = vadd.f32 %v649, %v324
        %v658 = vadd.f32 %v650, %v333
        %v659 = vadd.f32 %v651, %v342
        %660 = vst.msk [vmem:[%s205] sm:$0xff] %vm635, %v652
        %661 = vst.msk [vmem:[%s205 + $0x8] sm:$0xff] %vm635, %v653
        %662 = vst.msk [vmem:[%s205 + $0x10] sm:$0xff] %vm635, %v654
        %663 = vst.msk [vmem:[%s205 + $0x18] sm:$0xff] %vm635, %v655
        %664 = vst.msk [vmem:[%s205 + $0x20] sm:$0xff] %vm635, %v656
        %665 = vst.msk [vmem:[%s205 + $0x28] sm:$0xff] %vm635, %v657
        %666 = vst.msk [vmem:[%s205 + $0x30] sm:$0xff] %vm635, %v658
        %667 = vst.msk [vmem:[%s205 + $0x38] sm:$0xff] %vm635, %v659
      $region32: #{tpu_custom_call.1} parent=23 // pred_fallthru
        _
      %s668 = smul.u32 8, %s19
      %p669 = scmp.lt.s32.totalorder %s668, 15
      %s670 = scalar_select %p669, %s668, 15
      %s671 = smul.addr %s670, 8
      %s672 = scalar_lea.vmem %s1, %s671
      %s673 = smul.u32 8, %s19
      %p674 = scmp.lt.s32.totalorder %s673, 15
      %s675 = scalar_select %p674, %s673, 15
      %s676 = smul.addr %s675, 8
      %s677 = scalar_lea.vmem %s2, %s676
      // Predicated region
      $region33: #{tpu_custom_call.1} parent=23 // pred_check
        %p678 = pneg %p81
      $region34: #{tpu_custom_call.1} parent=23 // pred_check_branch
        %680 = sbr.rel (%p678) target = $region36
      $region35: #{tpu_custom_call.1} parent=23 // pred_region
        %s681 = smul.u32 8, %s19
      $region36: #{tpu_custom_call.1} parent=23 // pred_fallthru
        _
      // Predicated region
      $region37: #{tpu_custom_call.1} parent=23 // pred_check
        %p682 = pneg %p107
      $region38: #{tpu_custom_call.1} parent=23 // pred_check_branch
        %684 = sbr.rel (%p682) target = $region40
      $region39: #{tpu_custom_call.1} parent=23 // pred_region
        %s685 = smul.u32 8, %s19
      $region40: #{tpu_custom_call.1} parent=23 // pred_fallthru
        _
    $region24: #{tpu_custom_call.1} parent=5 // pred_fallthru
      _
    %p686 = scmp.le.s32.totalorder 2, %s9
    // Predicated region
    $region41: #{tpu_custom_call.1} parent=5 // pred_check
      %p687 = pneg %p686
    $region42: #{tpu_custom_call.1} parent=5 // pred_check_branch
      %689 = sbr.rel (%p687) target = $region44
    $region43: #{tpu_custom_call.1} parent=5 // pred_region
      %s690 = ssub.s32 %s9, 2
      // Predicated region
      $region45: #{tpu_custom_call.1} parent=43 // pred_check
        %p691 = pneg %p87
      $region46: #{tpu_custom_call.1} parent=43 // pred_check_branch
        %693 = sbr.rel (%p691) target = $region48
      $region47: #{tpu_custom_call.1} parent=43 // pred_region
        %s694 = smul.u32 8, %s22
        %p695 = scmp.lt.s32.totalorder %s694, 15
        %s696 = scalar_select %p695, %s694, 15
        %s697 = smul.addr %s696, 8
        %s698 = scalar_lea.vmem %s1, %s697
      $region48: #{tpu_custom_call.1} parent=43 // pred_fallthru
        _
      // Predicated region
      $region49: #{tpu_custom_call.1} parent=43 // pred_check
        %p699 = pneg %p113
      $region50: #{tpu_custom_call.1} parent=43 // pred_check_branch
        %701 = sbr.rel (%p699) target = $region52
      $region51: #{tpu_custom_call.1} parent=43 // pred_region
        %s702 = smul.u32 8, %s22
        %p703 = scmp.lt.s32.totalorder %s702, 15
        %s704 = scalar_select %p703, %s702, 15
        %s705 = smul.addr %s704, 8
        %s706 = scalar_lea.vmem %s2, %s705
      $region52: #{tpu_custom_call.1} parent=43 // pred_fallthru
        _
    $region44: #{tpu_custom_call.1} parent=5 // pred_fallthru
      _
  $region6: #{tpu_custom_call.1} parent=0 // loop_footer
    %s13 = sadd.s32 1, %s9
  $region7: #{tpu_custom_call.1} parent=0 // loop_footer_branch
    %8 = sbr.rel target = $region3
  $region8: #{tpu_custom_call.1} parent=0 // loop_exit
    _

</llo_original>
